<compile_context>
chip_gen: v6e
topology: v6e:2x2x1
jax: 0.10.0
libtpu: 0.0.40
codegen_flags: <defaults>
</compile_context>

<pallas_src>
import functools

import jax
import jax.numpy as jnp
from jax.experimental import pallas as pl
from jax.experimental.pallas import tpu as pltpu


def _round_up(x, m):
    return ((x + m - 1) // m) * m


# ----------------------------- expert kernel -------------------------------
def expert_kernel(ids_ref, cnt_ref, x_ref, w1_ref, b1_ref, gamma_ref, beta_ref,
                  w2_ref, b2_ref, gates_ref, y_ref):
    """Grid = (num_batch_tiles, E). The expert axis is last ("arbitrary"), so
    the (bt, D_out_pad) output block stays resident in VMEM and is used as the
    combine accumulator across experts."""
    e = pl.program_id(1)

    @pl.when(e == 0)
    def _init():
        y_ref[...] = jnp.zeros_like(y_ref)

    # Only the first `num_active` expert steps do work; padded tail steps map
    # (via the index_map) onto the last active expert so their weight DMA is a
    # no-op revisit and their compute is skipped here.
    @pl.when(e < cnt_ref[0])
    def _compute():
        expert_id = ids_ref[e]                                   # SMEM scalar

        # fc1: bf16 operands on the MXU, f32 accumulation.
        x = x_ref[...]                                           # (bt, D_in) f32
        h = jnp.dot(x.astype(jnp.bfloat16), w1_ref[0],
                    preferred_element_type=jnp.float32) + b1_ref[0]

        # LayerNorm over hidden dim (eps=1e-5, elementwise affine), all f32.
        mu = jnp.mean(h, axis=-1, keepdims=True)
        var = jnp.mean(jnp.square(h - mu), axis=-1, keepdims=True)
        h = (h - mu) * jax.lax.rsqrt(var + 1e-5) * gamma_ref[0] + beta_ref[0]

        # ReLU (+ dropout identity in eval mode).
        h = jnp.maximum(h, 0.0)

        # fc2 + sigmoid: bf16 operands, f32 accumulation.
        o = jnp.dot(h.astype(jnp.bfloat16), w2_ref[0],
                    preferred_element_type=jnp.float32) + b2_ref[0]
        o = jax.nn.sigmoid(o)

        # Select this expert's gate column from the dense (bt, E) gate block
        # (lane-major; avoids a lane-width-1 gate operand), then combine.
        col = jax.lax.broadcasted_iota(jnp.int32, gates_ref.shape, 1)
        gate = jnp.sum(jnp.where(col == expert_id, gates_ref[...], 0.0),
                       axis=1, keepdims=True)                    # (bt, 1) f32
        y_ref[...] = y_ref[...] + gate * o


def moe_experts(x, gates_dense, active_ids, num_active, params):
    """x: (B, D_in) f32; gates_dense: (B, E) f32; returns combined y (B, D_out)."""
    B, D_in = x.shape
    E = gates_dense.shape[1]
    H = params["w1"].shape[2]
    D_out = params["w2"].shape[2]

    # Lane-dense output: pad D_out up to a multiple of 128 (full vst stores).
    Do_pad = _round_up(max(D_out, 128), 128)
    # MXU-sized batch tiles where the batch allows it; tile is a multiple of 8.
    bt = min(128, _round_up(B, 8))
    B_pad = _round_up(B, bt)

    x_p = jnp.pad(x, ((0, B_pad - B), (0, 0)))
    gates_p = jnp.pad(gates_dense, ((0, B_pad - B), (0, 0)))
    w1 = params["w1"].astype(jnp.bfloat16)                       # (E, D_in, H)
    w2 = jnp.pad(params["w2"],
                 ((0, 0), (0, 0), (0, Do_pad - D_out))).astype(jnp.bfloat16)
    b2 = jnp.pad(params["b2"], ((0, 0), (0, 0), (0, Do_pad - D_out)))

    # TODO(synk): for large D_in / H add a K-reduction grid axis with an f32
    #             VMEM scratch accumulator instead of whole-weight blocks, and
    #             consider pipeline_mode=pl.Buffered(3) on the weight specs if
    #             weight DMA stays exposed at small per-expert batch.

    def per_expert(shape):
        return pl.BlockSpec((1,) + tuple(shape[1:]),
                            lambda bi, e, ids, cnt: (ids[e], 0, 0))

    grid_spec = pltpu.PrefetchScalarGridSpec(
        num_scalar_prefetch=2,
        grid=(B_pad // bt, E),
        in_specs=[
            pl.BlockSpec((bt, D_in), lambda bi, e, ids, cnt: (bi, 0)),  # x
            per_expert(w1.shape),                                       # w1
            per_expert(params["b1"].shape),                             # b1
            per_expert(params["gamma"].shape),                          # gamma
            per_expert(params["beta"].shape),                           # beta
            per_expert(w2.shape),                                       # w2
            per_expert(b2.shape),                                       # b2
            pl.BlockSpec((bt, E), lambda bi, e, ids, cnt: (bi, 0)),     # gates
        ],
        out_specs=pl.BlockSpec((bt, Do_pad), lambda bi, e, ids, cnt: (bi, 0)),
    )

    y = pl.pallas_call(
        expert_kernel,
        out_shape=jax.ShapeDtypeStruct((B_pad, Do_pad), jnp.float32),
        grid_spec=grid_spec,
        compiler_params=pltpu.CompilerParams(
            # batch tiles shard across TensorCores (v7x megacore); expert axis
            # is a reduction into the resident output block.
            dimension_semantics=("parallel", "arbitrary"),
            # Explicit, generation-safe scoped-VMEM budget (< 64 MiB physical
            # on v7x, >= defaults on v5e/v6e).
            vmem_limit_bytes=48 * 1024 * 1024,
        ),
    )(active_ids, num_active, x_p, w1, params["b1"], params["gamma"],
      params["beta"], w2, b2, gates_p)
    return y[:B, :D_out]


# ----------------------------- glue (plain JAX) ----------------------------
def cv_squared(v):
    v = v.astype(jnp.float32)
    if v.shape[0] == 1:
        return jnp.zeros((), jnp.float32)
    return jnp.var(v, ddof=1) / (jnp.mean(v) ** 2 + 1e-10)


@functools.partial(jax.jit, static_argnames=("k",))
def moe_forward(x, params, k, loss_coef=0.5):
    B = x.shape[0]
    E = params["w_gate"].shape[1]

    # --- noisy_top_k_gating, eval path (clean logits, softmax, top-k, renorm).
    # The (B, D_in) x (D_in, E) gating matmul + softmax is tiny; a dedicated
    # one-block Pallas call is pure launch/DMA overhead, so XLA handles it.
    probs = jax.nn.softmax(x @ params["w_gate"], axis=1)            # (B, E)
    top_logits, top_indices = jax.lax.top_k(probs, min(k + 1, E))
    top_k_logits = top_logits[:, :k]
    top_k_indices = top_indices[:, :k]
    top_k_gates = top_k_logits / (jnp.sum(top_k_logits, axis=1, keepdims=True)
                                  + 1e-6)
    gates = jnp.zeros((B, E), jnp.float32).at[
        jnp.arange(B)[:, None], top_k_indices].set(top_k_gates)
    load = jnp.sum(gates > 0, axis=0)

    # --- aux loss ---
    importance = jnp.sum(gates, axis=0)
    loss = (cv_squared(importance) + cv_squared(load)) * loss_coef

    # --- sparse dispatch: only experts with at least one nonzero gate run ---
    active = jnp.any(gates > 0.0, axis=0)                           # (E,)
    num_active = jnp.sum(active).astype(jnp.int32)
    order = jnp.argsort(jnp.where(active, 0, 1).astype(jnp.int32)).astype(jnp.int32)
    last_active = order[jnp.maximum(num_active - 1, 0)]
    slots = jnp.arange(E, dtype=jnp.int32)
    active_ids = jnp.where(slots < num_active, order, last_active)  # (E,) int32

    y = moe_experts(x, gates, active_ids, jnp.reshape(num_active, (1,)), params)
    return y, loss


def init_params(key, input_size, output_size, num_experts, hidden_size):
    ks = jax.random.split(key, 8)
    s1 = 1.0 / jnp.sqrt(input_size)
    s2 = 1.0 / jnp.sqrt(hidden_size)
    return {
        "w_gate": 0.05 * jax.random.normal(ks[0], (input_size, num_experts), jnp.float32),
        "w1": jax.random.uniform(ks[1], (num_experts, input_size, hidden_size),
                                 jnp.float32, -s1, s1),
        "b1": jax.random.uniform(ks[2], (num_experts, 1, hidden_size),
                                 jnp.float32, -s1, s1),
        "gamma": jnp.ones((num_experts, 1, hidden_size), jnp.float32),
        "beta": jnp.zeros((num_experts, 1, hidden_size), jnp.float32),
        "w2": jax.random.uniform(ks[3], (num_experts, hidden_size, output_size),
                                 jnp.float32, -s2, s2),
        "b2": jax.random.uniform(ks[4], (num_experts, 1, output_size),
                                 jnp.float32, -s2, s2),
    }


def reference_forward(x, params, k):
    """Pure-JAX dense reference mirroring the kernel's bf16 matmul casts."""
    B = x.shape[0]
    E = params["w_gate"].shape[1]
    probs = jax.nn.softmax(x @ params["w_gate"], axis=1)
    top_logits, top_idx = jax.lax.top_k(probs, min(k + 1, E))
    tkl, tki = top_logits[:, :k], top_idx[:, :k]
    tkg = tkl / (jnp.sum(tkl, axis=1, keepdims=True) + 1e-6)
    gates = jnp.zeros((B, E), jnp.float32).at[jnp.arange(B)[:, None], tki].set(tkg)
    w1 = params["w1"].astype(jnp.bfloat16)
    w2 = params["w2"].astype(jnp.bfloat16)
    y = jnp.zeros((B, params["w2"].shape[2]), jnp.float32)
    for e in range(E):
        h = jnp.dot(x.astype(jnp.bfloat16), w1[e],
                    preferred_element_type=jnp.float32) + params["b1"][e]
        mu = jnp.mean(h, axis=-1, keepdims=True)
        var = jnp.mean(jnp.square(h - mu), axis=-1, keepdims=True)
        h = (h - mu) * jax.lax.rsqrt(var + 1e-5) * params["gamma"][e] + params["beta"][e]
        h = jnp.maximum(h, 0.0)
        o = jnp.dot(h.astype(jnp.bfloat16), w2[e],
                    preferred_element_type=jnp.float32) + params["b2"][e]
        y = y + gates[:, e:e + 1] * jax.nn.sigmoid(o)
    return y


if __name__ == "__main__":
    B, D_in, H, D_out, E, K = 8, 32, 64, 16, 4, 2
    key = jax.random.PRNGKey(0)
    k_x, k_p = jax.random.split(key)
    x = jax.random.normal(k_x, (B, D_in), jnp.float32)
    params = init_params(k_p, D_in, D_out, E, H)

    y, loss = moe_forward(x, params, K)
    jax.block_until_ready((y, loss))

    y_ref = reference_forward(x, params, K)
    assert y.shape == (B, D_out)
    assert jnp.all(jnp.isfinite(y)) and jnp.isfinite(loss)
    assert float(jnp.max(jnp.abs(y - y_ref))) < 2e-2
    print("KERNEL_OK")
</pallas_src>

<mosaic_0001>
module attributes {stable_mosaic.version = 11 : i64} {
  func.func @expert_kernel(%arg0: i32, %arg1: i32, %arg2: memref<4xi32, #tpu.memory_space<smem>>, %arg3: memref<1xi32, #tpu.memory_space<smem>>, %arg4: memref<8x32xf32, #tpu.memory_space<vmem>>, %arg5: memref<1x32x64xbf16, #tpu.memory_space<vmem>>, %arg6: memref<1x1x64xf32, #tpu.memory_space<vmem>>, %arg7: memref<1x1x64xf32, #tpu.memory_space<vmem>>, %arg8: memref<1x1x64xf32, #tpu.memory_space<vmem>>, %arg9: memref<1x64x128xbf16, #tpu.memory_space<vmem>>, %arg10: memref<1x1x128xf32, #tpu.memory_space<vmem>>, %arg11: memref<8x4xf32, #tpu.memory_space<vmem>>, %arg12: memref<8x128xf32, #tpu.memory_space<vmem>>) attributes {dimension_semantics = [#tpu.dimension_semantics<parallel>, #tpu.dimension_semantics<arbitrary>], iteration_bounds = array<i64: 1, 4>, scalar_prefetch = 2 : i64, scratch_operands = 0 : i64, tpu.core_type = #tpu.core_type<tc>, window_params = [{transform_indices = @transform_0, window_bounds = array<i64: 8, 32>}, {transform_indices = @transform_1, window_bounds = array<i64: 1, 32, 64>}, {transform_indices = @transform_2, window_bounds = array<i64: 1, 1, 64>}, {transform_indices = @transform_3, window_bounds = array<i64: 1, 1, 64>}, {transform_indices = @transform_4, window_bounds = array<i64: 1, 1, 64>}, {transform_indices = @transform_5, window_bounds = array<i64: 1, 64, 128>}, {transform_indices = @transform_6, window_bounds = array<i64: 1, 1, 128>}, {transform_indices = @transform_7, window_bounds = array<i64: 8, 4>}, {transform_indices = @transform_8, window_bounds = array<i64: 8, 128>}]} {
    %c0_i32 = arith.constant 0 : i32
    %0 = arith.cmpi eq, %arg1, %c0_i32 : i32
    %1 = arith.extui %0 : i1 to i32
    %c0_i32_0 = arith.constant 0 : i32
    %2 = arith.cmpi ne, %1, %c0_i32_0 : i32
    scf.if %2 {
      %cst = arith.constant 0.000000e+00 : f32
      %7 = vector.broadcast %cst : f32 to vector<8x128xf32>
      %c0_2 = arith.constant 0 : index
      %c0_3 = arith.constant 0 : index
      %8 = vector.load %arg12[%c0_2, %c0_3] : memref<8x128xf32, #tpu.memory_space<vmem>>, vector<8x128xf32>
      tpu.vector_store %arg12[%c0_2, %c0_3], %7 {strides = array<i32>} : memref<8x128xf32, #tpu.memory_space<vmem>>, vector<8x128xf32>,
    } else {
    }
    %c0 = arith.constant 0 : index
    %3 = memref.load %arg3[%c0] : memref<1xi32, #tpu.memory_space<smem>>
    %4 = arith.cmpi slt, %arg1, %3 : i32
    %5 = arith.extui %4 : i1 to i32
    %c0_i32_1 = arith.constant 0 : i32
    %6 = arith.cmpi ne, %5, %c0_i32_1 : i32
    scf.if %6 {
      %7 = arith.index_cast %arg1 : i32 to index
      %8 = memref.load %arg2[%7] : memref<4xi32, #tpu.memory_space<smem>>
      %c0_2 = arith.constant 0 : index
      %c0_3 = arith.constant 0 : index
      %9 = vector.load %arg4[%c0_2, %c0_3] : memref<8x32xf32, #tpu.memory_space<vmem>>, vector<8x32xf32>
      %10 = arith.truncf %9 : vector<8x32xf32> to vector<8x32xbf16>
      %c0_4 = arith.constant 0 : index
      %c0_5 = arith.constant 0 : index
      %c0_6 = arith.constant 0 : index
      %11 = vector.load %arg5[%c0_4, %c0_5, %c0_6] : memref<1x32x64xbf16, #tpu.memory_space<vmem>>, vector<1x32x64xbf16>
      %12 = vector.shape_cast %11 : vector<1x32x64xbf16> to vector<32x64xbf16>
      %cst = arith.constant dense<0.000000e+00> : vector<8x64xf32>
      %13 = tpu.matmul %10, %12, %cst {dimension_numbers = #tpu.dot_dimension_numbers<[1], [0], [0], [1], [0, 0, 1, 1], [], []>} : vector<8x32xbf16>, vector<32x64xbf16>, vector<8x64xf32> -> vector<8x64xf32>
      %c0_7 = arith.constant 0 : index
      %c0_8 = arith.constant 0 : index
      %c0_9 = arith.constant 0 : index
      %14 = vector.load %arg6[%c0_7, %c0_8, %c0_9] : memref<1x1x64xf32, #tpu.memory_space<vmem>>, vector<1x1x64xf32>
      %15 = vector.shape_cast %14 : vector<1x1x64xf32> to vector<1x64xf32>
      %16 = vector.broadcast %15 : vector<1x64xf32> to vector<8x64xf32>
      %17 = arith.addf %13, %16 : vector<8x64xf32>
      %cst_10 = arith.constant dense<0.000000e+00> : vector<8xf32>
      %18 = vector.multi_reduction <add>, %17, %cst_10 [1] : vector<8x64xf32> to vector<8xf32>
      %19 = vector.shape_cast %18 : vector<8xf32> to vector<8x1xf32>
      %cst_11 = arith.constant 6.400000e+01 : f32
      %20 = vector.broadcast %cst_11 : f32 to vector<8x1xf32>
      %21 = arith.divf %19, %20 : vector<8x1xf32>
      %22 = vector.broadcast %21 : vector<8x1xf32> to vector<8x64xf32>
      %23 = arith.subf %17, %22 : vector<8x64xf32>
      %24 = arith.mulf %23, %23 : vector<8x64xf32>
      %cst_12 = arith.constant dense<0.000000e+00> : vector<8xf32>
      %25 = vector.multi_reduction <add>, %24, %cst_12 [1] : vector<8x64xf32> to vector<8xf32>
      %26 = vector.shape_cast %25 : vector<8xf32> to vector<8x1xf32>
      %cst_13 = arith.constant 6.400000e+01 : f32
      %27 = vector.broadcast %cst_13 : f32 to vector<8x1xf32>
      %28 = arith.divf %26, %27 : vector<8x1xf32>
      %29 = vector.broadcast %21 : vector<8x1xf32> to vector<8x64xf32>
      %30 = arith.subf %17, %29 : vector<8x64xf32>
      %cst_14 = arith.constant 9.99999974E-6 : f32
      %31 = vector.broadcast %cst_14 : f32 to vector<8x1xf32>
      %32 = arith.addf %28, %31 : vector<8x1xf32>
      %33 = math.rsqrt %32 : vector<8x1xf32>
      %34 = vector.broadcast %33 : vector<8x1xf32> to vector<8x64xf32>
      %35 = arith.mulf %30, %34 : vector<8x64xf32>
      %c0_15 = arith.constant 0 : index
      %c0_16 = arith.constant 0 : index
      %c0_17 = arith.constant 0 : index
      %36 = vector.load %arg7[%c0_15, %c0_16, %c0_17] : memref<1x1x64xf32, #tpu.memory_space<vmem>>, vector<1x1x64xf32>
      %37 = vector.shape_cast %36 : vector<1x1x64xf32> to vector<1x64xf32>
      %38 = vector.broadcast %37 : vector<1x64xf32> to vector<8x64xf32>
      %39 = arith.mulf %35, %38 : vector<8x64xf32>
      %c0_18 = arith.constant 0 : index
      %c0_19 = arith.constant 0 : index
      %c0_20 = arith.constant 0 : index
      %40 = vector.load %arg8[%c0_18, %c0_19, %c0_20] : memref<1x1x64xf32, #tpu.memory_space<vmem>>, vector<1x1x64xf32>
      %41 = vector.shape_cast %40 : vector<1x1x64xf32> to vector<1x64xf32>
      %42 = vector.broadcast %41 : vector<1x64xf32> to vector<8x64xf32>
      %43 = arith.addf %39, %42 : vector<8x64xf32>
      %cst_21 = arith.constant 0.000000e+00 : f32
      %44 = vector.broadcast %cst_21 : f32 to vector<8x64xf32>
      %45 = arith.maximumf %43, %44 : vector<8x64xf32>
      %46 = arith.truncf %45 : vector<8x64xf32> to vector<8x64xbf16>
      %c0_22 = arith.constant 0 : index
      %c0_23 = arith.constant 0 : index
      %c0_24 = arith.constant 0 : index
      %47 = vector.load %arg9[%c0_22, %c0_23, %c0_24] : memref<1x64x128xbf16, #tpu.memory_space<vmem>>, vector<1x64x128xbf16>
      %48 = vector.shape_cast %47 : vector<1x64x128xbf16> to vector<64x128xbf16>
      %cst_25 = arith.constant dense<0.000000e+00> : vector<8x128xf32>
      %49 = tpu.matmul %46, %48, %cst_25 {dimension_numbers = #tpu.dot_dimension_numbers<[1], [0], [0], [1], [0, 0, 1, 1], [], []>} : vector<8x64xbf16>, vector<64x128xbf16>, vector<8x128xf32> -> vector<8x128xf32>
      %c0_26 = arith.constant 0 : index
      %c0_27 = arith.constant 0 : index
      %c0_28 = arith.constant 0 : index
      %50 = vector.load %arg10[%c0_26, %c0_27, %c0_28] : memref<1x1x128xf32, #tpu.memory_space<vmem>>, vector<1x1x128xf32>
      %51 = vector.shape_cast %50 : vector<1x1x128xf32> to vector<1x128xf32>
      %52 = vector.broadcast %51 : vector<1x128xf32> to vector<8x128xf32>
      %53 = arith.addf %49, %52 : vector<8x128xf32>
      %54 = arith.negf %53 : vector<8x128xf32>
      %55 = math.exp %54 : vector<8x128xf32>
      %cst_29 = arith.constant 1.000000e+00 : f32
      %56 = vector.broadcast %cst_29 : f32 to vector<8x128xf32>
      %57 = arith.addf %56, %55 : vector<8x128xf32>
      %58 = arith.divf %56, %57 : vector<8x128xf32>
      %59 = tpu.iota {dimensions = array<i32: 1>} : vector<8x4xi32>
      %60 = vector.broadcast %8 : i32 to vector<8x4xi32>
      %61 = arith.cmpi eq, %59, %60 : vector<8x4xi32>
      %c0_30 = arith.constant 0 : index
      %c0_31 = arith.constant 0 : index
      %62 = vector.load %arg11[%c0_30, %c0_31] : memref<8x4xf32, #tpu.memory_space<vmem>>, vector<8x4xf32>
      %cst_32 = arith.constant 0.000000e+00 : f32
      %63 = vector.broadcast %cst_32 : f32 to vector<8x4xf32>
      %64 = arith.select %61, %62, %63 : vector<8x4xi1>, vector<8x4xf32>
      %cst_33 = arith.constant dense<0.000000e+00> : vector<8xf32>
      %65 = vector.multi_reduction <add>, %64, %cst_33 [1] : vector<8x4xf32> to vector<8xf32>
      %66 = vector.shape_cast %65 : vector<8xf32> to vector<8x1xf32>
      %c0_34 = arith.constant 0 : index
      %c0_35 = arith.constant 0 : index
      %67 = vector.load %arg12[%c0_34, %c0_35] : memref<8x128xf32, #tpu.memory_space<vmem>>, vector<8x128xf32>
      %68 = vector.broadcast %66 : vector<8x1xf32> to vector<8x128xf32>
      %69 = arith.mulf %68, %58 : vector<8x128xf32>
      %70 = arith.addf %67, %69 : vector<8x128xf32>
      %c0_36 = arith.constant 0 : index
      %c0_37 = arith.constant 0 : index
      %71 = vector.load %arg12[%c0_36, %c0_37] : memref<8x128xf32, #tpu.memory_space<vmem>>, vector<8x128xf32>
      tpu.vector_store %arg12[%c0_36, %c0_37], %70 {strides = array<i32>} : memref<8x128xf32, #tpu.memory_space<vmem>>, vector<8x128xf32>,
    } else {
    }
    return
  }
  func.func @transform_0(%arg0: i32, %arg1: i32, %arg2: memref<4xi32, #tpu.memory_space<smem>>, %arg3: memref<1xi32, #tpu.memory_space<smem>>) -> (i32, i32) {
    %c0_i32 = arith.constant 0 : i32
    %c0_i32_0 = arith.constant 0 : i32
    return %arg0, %c0_i32 : i32, i32
  }
  func.func @transform_1(%arg0: i32, %arg1: i32, %arg2: memref<4xi32, #tpu.memory_space<smem>>, %arg3: memref<1xi32, #tpu.memory_space<smem>>) -> (i32, i32, i32) {
    %0 = arith.index_cast %arg1 : i32 to index
    %1 = memref.load %arg2[%0] : memref<4xi32, #tpu.memory_space<smem>>
    %c0_i32 = arith.constant 0 : i32
    %c0_i32_0 = arith.constant 0 : i32
    %c0_i32_1 = arith.constant 0 : i32
    return %1, %c0_i32, %c0_i32_0 : i32, i32, i32
  }
  func.func @transform_2(%arg0: i32, %arg1: i32, %arg2: memref<4xi32, #tpu.memory_space<smem>>, %arg3: memref<1xi32, #tpu.memory_space<smem>>) -> (i32, i32, i32) {
    %0 = arith.index_cast %arg1 : i32 to index
    %1 = memref.load %arg2[%0] : memref<4xi32, #tpu.memory_space<smem>>
    %c0_i32 = arith.constant 0 : i32
    %c0_i32_0 = arith.constant 0 : i32
    %c0_i32_1 = arith.constant 0 : i32
    return %1, %c0_i32, %c0_i32_0 : i32, i32, i32
  }
  func.func @transform_3(%arg0: i32, %arg1: i32, %arg2: memref<4xi32, #tpu.memory_space<smem>>, %arg3: memref<1xi32, #tpu.memory_space<smem>>) -> (i32, i32, i32) {
    %0 = arith.index_cast %arg1 : i32 to index
    %1 = memref.load %arg2[%0] : memref<4xi32, #tpu.memory_space<smem>>
    %c0_i32 = arith.constant 0 : i32
    %c0_i32_0 = arith.constant 0 : i32
    %c0_i32_1 = arith.constant 0 : i32
    return %1, %c0_i32, %c0_i32_0 : i32, i32, i32
  }
  func.func @transform_4(%arg0: i32, %arg1: i32, %arg2: memref<4xi32, #tpu.memory_space<smem>>, %arg3: memref<1xi32, #tpu.memory_space<smem>>) -> (i32, i32, i32) {
    %0 = arith.index_cast %arg1 : i32 to index
    %1 = memref.load %arg2[%0] : memref<4xi32, #tpu.memory_space<smem>>
    %c0_i32 = arith.constant 0 : i32
    %c0_i32_0 = arith.constant 0 : i32
    %c0_i32_1 = arith.constant 0 : i32
    return %1, %c0_i32, %c0_i32_0 : i32, i32, i32
  }
  func.func @transform_5(%arg0: i32, %arg1: i32, %arg2: memref<4xi32, #tpu.memory_space<smem>>, %arg3: memref<1xi32, #tpu.memory_space<smem>>) -> (i32, i32, i32) {
    %0 = arith.index_cast %arg1 : i32 to index
    %1 = memref.load %arg2[%0] : memref<4xi32, #tpu.memory_space<smem>>
    %c0_i32 = arith.constant 0 : i32
    %c0_i32_0 = arith.constant 0 : i32
    %c0_i32_1 = arith.constant 0 : i32
    return %1, %c0_i32, %c0_i32_0 : i32, i32, i32
  }
  func.func @transform_6(%arg0: i32, %arg1: i32, %arg2: memref<4xi32, #tpu.memory_space<smem>>, %arg3: memref<1xi32, #tpu.memory_space<smem>>) -> (i32, i32, i32) {
    %0 = arith.index_cast %arg1 : i32 to index
    %1 = memref.load %arg2[%0] : memref<4xi32, #tpu.memory_space<smem>>
    %c0_i32 = arith.constant 0 : i32
    %c0_i32_0 = arith.constant 0 : i32
    %c0_i32_1 = arith.constant 0 : i32
    return %1, %c0_i32, %c0_i32_0 : i32, i32, i32
  }
  func.func @transform_7(%arg0: i32, %arg1: i32, %arg2: memref<4xi32, #tpu.memory_space<smem>>, %arg3: memref<1xi32, #tpu.memory_space<smem>>) -> (i32, i32) {
    %c0_i32 = arith.constant 0 : i32
    %c0_i32_0 = arith.constant 0 : i32
    return %arg0, %c0_i32 : i32, i32
  }
  func.func @transform_8(%arg0: i32, %arg1: i32, %arg2: memref<4xi32, #tpu.memory_space<smem>>, %arg3: memref<1xi32, #tpu.memory_space<smem>>) -> (i32, i32) {
    %c0_i32 = arith.constant 0 : i32
    %c0_i32_0 = arith.constant 0 : i32
    return %arg0, %c0_i32 : i32, i32
  }
}

</mosaic_0001>

<llo_original>
// kernel: moe_forward.1
$region0: #{moe_forward.1}
  #allocation0 [shape = 'u32[]', space=smem, size = 0x4, offset = 0x4, fixed_abs, tag = 'smem constant byte address 0x4 - core index']
  #allocation1 [shape = 'u32[144,128]{1,0:T(1,128)}', space=vmem, size = 0x12000, scoped, tag = 'internal scratch']
  #allocation2 [shape = 's32[1]{0}', space=sflag, size = 0x4, scoped, tag = 'scoped memory for moe_forward.1']
  #allocation3 [shape = 'u8[512]{0}', space=smem, size = 0x200, scoped, tag = 'prefetched SMEM operand 0']
  #allocation4 [shape = 's32[1]{0:T(128)S(6)}', space=smem, size = 0x200, scoped, tag = 'prefetched SMEM operand 1']
  %s0 = inlined_call_operand.vmem [shape: s32[4], index: 0, kind: input, shape index: {}]
  %s1 = inlined_call_operand.<no memory space> [shape: s32[1], index: 1, kind: input, shape index: {}]
  %s2 = inlined_call_operand.vmem [shape: f32[8,32], index: 2, kind: input, shape index: {}]
  %s3 = inlined_call_operand.vmem [shape: bf16[4,32,64], index: 3, kind: input, shape index: {}]
  %s4 = inlined_call_operand.vmem [shape: f32[4,1,64], index: 4, kind: input, shape index: {}]
  %s5 = inlined_call_operand.vmem [shape: f32[4,1,64], index: 5, kind: input, shape index: {}]
  %s6 = inlined_call_operand.vmem [shape: f32[4,1,64], index: 6, kind: input, shape index: {}]
  %s7 = inlined_call_operand.vmem [shape: bf16[4,64,128], index: 7, kind: input, shape index: {}]
  %s8 = inlined_call_operand.vmem [shape: f32[4,1,128], index: 8, kind: input, shape index: {}]
  %s9 = inlined_call_operand.vmem [shape: f32[8,4], index: 9, kind: input, shape index: {}]
  %s10 = inlined_call_operand.hbm [shape: f32[8,128], index: 10, kind: output, shape index: {}]
  %s11 = sld [smem:[#allocation0]]
  $region73: #{moe_forward.1} parent=0
    _
  %s13 = ssub.s32 1, %s11
  %s14 = scalar_select 0, %s13, %s11
  %s15 = sshll.u32 %s0, 4
  %s16 = int_to_ptr.vmem [resolvable:$true] %s15
  %18 = dma.vmem_to_smem %s16, 16, [#allocation3], [#allocation2]
  %19 = sst [smem:[#allocation4]] %s1
  %20 = dma.done [#allocation2], 16
  %21 = sfence
  $region1: #{moe_forward.1} parent=0
    #allocation5 [shape = 'u8[4096]{0}', space=vmem, size = 0x1000, scoped, tag = 'output window, operand 0, single buffered']
    #allocation6 [shape = 's32[2]{0}', space=sflag, size = 0x8, scoped, tag = 'scoped memory for moe_forward.1']
    %22 = vsyncpa [#allocation6], 0
    loop: start=0, step=1, limit=6
    $region2: #{moe_forward.1} parent=1 // loop_pre_header
      _
    $region3: #{moe_forward.1} parent=1 // loop_header
      %s24 = sphi 0, %s28
      %p25 = scmp.ge.s32.totalorder %s24, 6
      %s31 = sphi 0, %s43
      %s32 = sphi 0, %s39
      %s33 = sphi 0, %s31
      %s34 = sphi 0, %s32
      %s35 = sphi 0, %s33
      %s36 = sphi 0, %s34
      %s46 = sphi 0, %s48
      %s49 = sphi 0, %s46
      %s50 = sphi 0, %s49
      %s66 = sphi 0, %s50
      %s74 = sphi 0, %s76
      %s77 = sphi 0, %s74
      %s78 = sphi 0, %s77
      %s94 = sphi 0, %s78
      %s102 = sphi 0, %s104
      %s105 = sphi 0, %s102
      %s106 = sphi 0, %s105
      %s122 = sphi 0, %s106
      %s130 = sphi 0, %s132
      %s133 = sphi 0, %s130
      %s134 = sphi 0, %s133
      %s150 = sphi 0, %s134
      %s158 = sphi 0, %s160
      %s161 = sphi 0, %s158
      %s162 = sphi 0, %s161
      %s178 = sphi 0, %s162
      %s186 = sphi 0, %s188
      %s189 = sphi 0, %s186
      %s190 = sphi 0, %s189
      %s206 = sphi 0, %s190
      %s214 = sphi 0, %s216
      %s217 = sphi 0, %s214
      %s218 = sphi 0, %s217
      %s234 = sphi 0, %s218
      %s240 = sphi 0, %s242
      %s243 = sphi 0, %s240
      %s244 = sphi 0, %s243
      %s260 = sphi 0, %s244
      %s266 = sphi 0, %s268
      %s269 = sphi 0, %s266
      %s270 = sphi 0, %s269
      %s286 = sphi 0, %s270
    $region4: #{moe_forward.1} parent=1 // loop_header_branch
      %27 = sbr.rel (%p25) target = $region8
    $region5: #{moe_forward.1} parent=1 // loop_body
      %s29 = ssub.s32 %s24, 1
      %s30 = ssub.s32 %s24, 2
      %s37 = sadd.s32 1, %s32
      %p38 = scmp.ge.s32.totalorder %s37, 4
      %s39 = scalar_select %p38, 0, %s37
      %s40 = sadd.s32 1, %s31
      %s41 = scalar_select %p38, %s40, %s31
      %p42 = scmp.ge.s32.totalorder %s41, 1
      %s43 = scalar_select %p42, 0, %s41
      %s44 = ssub.s32 %s31, %s43
      %p45 = scmp.eq.s32.totalorder %s44, 0
      %s47 = sadd.s32 %s46, 1
      %s48 = scalar_select %p45, %s46, %s47
      %p51 = pneg %p45
      %p52 = scmp.eq.s32.totalorder %s24, 3
      %p53 = por %p51, %p52
      %p54 = scmp.ne.s32.totalorder %s46, %s49
      %p55 = scmp.eq.s32.totalorder %s24, 0
      %p56 = por %p54, %p55
      %p57 = scmp.ne.s32.totalorder %s46, %s49
      %p58 = scmp.eq.s32.totalorder %s29, 3
      %p59 = por %p57, %p58
      %p60 = scmp.ne.s32.totalorder %s49, %s50
      %p61 = scmp.eq.s32.totalorder %s29, 0
      %p62 = por %p60, %p61
      %p63 = scmp.ne.s32.totalorder %s49, %s50
      %p64 = scmp.eq.s32.totalorder %s30, 3
      %p65 = por %p63, %p64
      %p67 = scmp.ne.s32.totalorder %s50, %s66
      %p68 = scmp.eq.s32.totalorder %s30, 0
      %p69 = por %p67, %p68
      %s70 = sld [smem:[#allocation3 + %s32]]
      %s71 = sld [smem:[#allocation3 + %s39]]
      %s72 = ssub.s32 %s70, %s71
      %p73 = scmp.eq.s32.totalorder %s72, 0
      %s75 = sadd.s32 %s74, 1
      %s76 = scalar_select %p73, %s74, %s75
      %p79 = pneg %p73
      %p80 = scmp.eq.s32.totalorder %s24, 3
      %p81 = por %p79, %p80
      %p82 = scmp.ne.s32.totalorder %s74, %s77
      %p83 = scmp.eq.s32.totalorder %s24, 0
      %p84 = por %p82, %p83
      %p85 = scmp.ne.s32.totalorder %s74, %s77
      %p86 = scmp.eq.s32.totalorder %s29, 3
      %p87 = por %p85, %p86
      %p88 = scmp.ne.s32.totalorder %s77, %s78
      %p89 = scmp.eq.s32.totalorder %s29, 0
      %p90 = por %p88, %p89
      %p91 = scmp.ne.s32.totalorder %s77, %s78
      %p92 = scmp.eq.s32.totalorder %s30, 3
      %p93 = por %p91, %p92
      %p95 = scmp.ne.s32.totalorder %s78, %s94
      %p96 = scmp.eq.s32.totalorder %s30, 0
      %p97 = por %p95, %p96
      %s98 = sld [smem:[#allocation3 + %s32]]
      %s99 = sld [smem:[#allocation3 + %s39]]
      %s100 = ssub.s32 %s98, %s99
      %p101 = scmp.eq.s32.totalorder %s100, 0
      %s103 = sadd.s32 %s102, 1
      %s104 = scalar_select %p101, %s102, %s103
      %p107 = pneg %p101
      %p108 = scmp.eq.s32.totalorder %s24, 3
      %p109 = por %p107, %p108
      %p110 = scmp.ne.s32.totalorder %s102, %s105
      %p111 = scmp.eq.s32.totalorder %s24, 0
      %p112 = por %p110, %p111
      %p113 = scmp.ne.s32.totalorder %s102, %s105
      %p114 = scmp.eq.s32.totalorder %s29, 3
      %p115 = por %p113, %p114
      %p116 = scmp.ne.s32.totalorder %s105, %s106
      %p117 = scmp.eq.s32.totalorder %s29, 0
      %p118 = por %p116, %p117
      %p119 = scmp.ne.s32.totalorder %s105, %s106
      %p120 = scmp.eq.s32.totalorder %s30, 3
      %p121 = por %p119, %p120
      %p123 = scmp.ne.s32.totalorder %s106, %s122
      %p124 = scmp.eq.s32.totalorder %s30, 0
      %p125 = por %p123, %p124
      %s126 = sld [smem:[#allocation3 + %s32]]
      %s127 = sld [smem:[#allocation3 + %s39]]
      %s128 = ssub.s32 %s126, %s127
      %p129 = scmp.eq.s32.totalorder %s128, 0
      %s131 = sadd.s32 %s130, 1
      %s132 = scalar_select %p129, %s130, %s131
      %p135 = pneg %p129
      %p136 = scmp.eq.s32.totalorder %s24, 3
      %p137 = por %p135, %p136
      %p138 = scmp.ne.s32.totalorder %s130, %s133
      %p139 = scmp.eq.s32.totalorder %s24, 0
      %p140 = por %p138, %p139
      %p141 = scmp.ne.s32.totalorder %s130, %s133
      %p142 = scmp.eq.s32.totalorder %s29, 3
      %p143 = por %p141, %p142
      %p144 = scmp.ne.s32.totalorder %s133, %s134
      %p145 = scmp.eq.s32.totalorder %s29, 0
      %p146 = por %p144, %p145
      %p147 = scmp.ne.s32.totalorder %s133, %s134
      %p148 = scmp.eq.s32.totalorder %s30, 3
      %p149 = por %p147, %p148
      %p151 = scmp.ne.s32.totalorder %s134, %s150
      %p152 = scmp.eq.s32.totalorder %s30, 0
      %p153 = por %p151, %p152
      %s154 = sld [smem:[#allocation3 + %s32]]
      %s155 = sld [smem:[#allocation3 + %s39]]
      %s156 = ssub.s32 %s154, %s155
      %p157 = scmp.eq.s32.totalorder %s156, 0
      %s159 = sadd.s32 %s158, 1
      %s160 = scalar_select %p157, %s158, %s159
      %p163 = pneg %p157
      %p164 = scmp.eq.s32.totalorder %s24, 3
      %p165 = por %p163, %p164
      %p166 = scmp.ne.s32.totalorder %s158, %s161
      %p167 = scmp.eq.s32.totalorder %s24, 0
      %p168 = por %p166, %p167
      %p169 = scmp.ne.s32.totalorder %s158, %s161
      %p170 = scmp.eq.s32.totalorder %s29, 3
      %p171 = por %p169, %p170
      %p172 = scmp.ne.s32.totalorder %s161, %s162
      %p173 = scmp.eq.s32.totalorder %s29, 0
      %p174 = por %p172, %p173
      %p175 = scmp.ne.s32.totalorder %s161, %s162
      %p176 = scmp.eq.s32.totalorder %s30, 3
      %p177 = por %p175, %p176
      %p179 = scmp.ne.s32.totalorder %s162, %s178
      %p180 = scmp.eq.s32.totalorder %s30, 0
      %p181 = por %p179, %p180
      %s182 = sld [smem:[#allocation3 + %s32]]
      %s183 = sld [smem:[#allocation3 + %s39]]
      %s184 = ssub.s32 %s182, %s183
      %p185 = scmp.eq.s32.totalorder %s184, 0
      %s187 = sadd.s32 %s186, 1
      %s188 = scalar_select %p185, %s186, %s187
      %p191 = pneg %p185
      %p192 = scmp.eq.s32.totalorder %s24, 3
      %p193 = por %p191, %p192
      %p194 = scmp.ne.s32.totalorder %s186, %s189
      %p195 = scmp.eq.s32.totalorder %s24, 0
      %p196 = por %p194, %p195
      %p197 = scmp.ne.s32.totalorder %s186, %s189
      %p198 = scmp.eq.s32.totalorder %s29, 3
      %p199 = por %p197, %p198
      %p200 = scmp.ne.s32.totalorder %s189, %s190
      %p201 = scmp.eq.s32.totalorder %s29, 0
      %p202 = por %p200, %p201
      %p203 = scmp.ne.s32.totalorder %s189, %s190
      %p204 = scmp.eq.s32.totalorder %s30, 3
      %p205 = por %p203, %p204
      %p207 = scmp.ne.s32.totalorder %s190, %s206
      %p208 = scmp.eq.s32.totalorder %s30, 0
      %p209 = por %p207, %p208
      %s210 = sld [smem:[#allocation3 + %s32]]
      %s211 = sld [smem:[#allocation3 + %s39]]
      %s212 = ssub.s32 %s210, %s211
      %p213 = scmp.eq.s32.totalorder %s212, 0
      %s215 = sadd.s32 %s214, 1
      %s216 = scalar_select %p213, %s214, %s215
      %p219 = pneg %p213
      %p220 = scmp.eq.s32.totalorder %s24, 3
      %p221 = por %p219, %p220
      %p222 = scmp.ne.s32.totalorder %s214, %s217
      %p223 = scmp.eq.s32.totalorder %s24, 0
      %p224 = por %p222, %p223
      %p225 = scmp.ne.s32.totalorder %s214, %s217
      %p226 = scmp.eq.s32.totalorder %s29, 3
      %p227 = por %p225, %p226
      %p228 = scmp.ne.s32.totalorder %s217, %s218
      %p229 = scmp.eq.s32.totalorder %s29, 0
      %p230 = por %p228, %p229
      %p231 = scmp.ne.s32.totalorder %s217, %s218
      %p232 = scmp.eq.s32.totalorder %s30, 3
      %p233 = por %p231, %p232
      %p235 = scmp.ne.s32.totalorder %s218, %s234
      %p236 = scmp.eq.s32.totalorder %s30, 0
      %p237 = por %p235, %p236
      %s238 = ssub.s32 %s31, %s43
      %p239 = scmp.eq.s32.totalorder %s238, 0
      %s241 = sadd.s32 %s240, 1
      %s242 = scalar_select %p239, %s240, %s241
      %p245 = pneg %p239
      %p246 = scmp.eq.s32.totalorder %s24, 3
      %p247 = por %p245, %p246
      %p248 = scmp.ne.s32.totalorder %s240, %s243
      %p249 = scmp.eq.s32.totalorder %s24, 0
      %p250 = por %p248, %p249
      %p251 = scmp.ne.s32.totalorder %s240, %s243
      %p252 = scmp.eq.s32.totalorder %s29, 3
      %p253 = por %p251, %p252
      %p254 = scmp.ne.s32.totalorder %s243, %s244
      %p255 = scmp.eq.s32.totalorder %s29, 0
      %p256 = por %p254, %p255
      %p257 = scmp.ne.s32.totalorder %s243, %s244
      %p258 = scmp.eq.s32.totalorder %s30, 3
      %p259 = por %p257, %p258
      %p261 = scmp.ne.s32.totalorder %s244, %s260
      %p262 = scmp.eq.s32.totalorder %s30, 0
      %p263 = por %p261, %p262
      %s264 = ssub.s32 %s31, %s43
      %p265 = scmp.eq.s32.totalorder %s264, 0
      %s267 = sadd.s32 %s266, 1
      %s268 = scalar_select %p265, %s266, %s267
      %p271 = pneg %p265
      %p272 = scmp.eq.s32.totalorder %s24, 3
      %p273 = por %p271, %p272
      %p274 = scmp.ne.s32.totalorder %s266, %s269
      %p275 = scmp.eq.s32.totalorder %s24, 0
      %p276 = por %p274, %p275
      %p277 = scmp.ne.s32.totalorder %s266, %s269
      %p278 = scmp.eq.s32.totalorder %s29, 3
      %p279 = por %p277, %p278
      %p280 = scmp.ne.s32.totalorder %s269, %s270
      %p281 = scmp.eq.s32.totalorder %s29, 0
      %p282 = por %p280, %p281
      %p283 = scmp.ne.s32.totalorder %s269, %s270
      %p284 = scmp.eq.s32.totalorder %s30, 3
      %p285 = por %p283, %p284
      %p287 = scmp.ne.s32.totalorder %s270, %s286
      %p288 = scmp.eq.s32.totalorder %s30, 0
      %p289 = por %p287, %p288
      %p290 = scmp.le.s32.totalorder 1, %s24
      %p291 = scmp.lt.s32.totalorder %s24, 5
      %p292 = pnand %p290, %p291
      %p293 = pneg %p292
      // Predicated region
      $region9: #{moe_forward.1} parent=5 // pred_check
        _
      $region10: #{moe_forward.1} parent=5 // pred_check_branch
        %295 = sbr.rel (%p292) target = $region12
      $region11: #{moe_forward.1} parent=5 // pred_region
        %s296 = ssub.s32 %s24, 1
        // Predicated region
        $region13: #{moe_forward.1} parent=11 // pred_check
          %p297 = pneg %p62
        $region14: #{moe_forward.1} parent=11 // pred_check_branch
          %299 = sbr.rel (%p297) target = $region16
        $region15: #{moe_forward.1} parent=11 // pred_region
          %p300 = scmp.lt.s32.totalorder %s33, 0
          %s301 = scalar_select %p300, %s33, 0
          %s302 = smul.addr %s301, 8
          %s303 = scalar_lea.vmem %s2, %s302
        $region16: #{moe_forward.1} parent=11 // pred_fallthru
          _
        // Predicated region
        $region17: #{moe_forward.1} parent=11 // pred_check
          %p304 = pneg %p256
        $region18: #{moe_forward.1} parent=11 // pred_check_branch
          %306 = sbr.rel (%p304) target = $region20
        $region19: #{moe_forward.1} parent=11 // pred_region
          %p307 = scmp.lt.s32.totalorder %s33, 0
          %s308 = scalar_select %p307, %s33, 0
          %s309 = smul.addr %s308, 8
          %s310 = scalar_lea.vmem %s9, %s309
        $region20: #{moe_forward.1} parent=11 // pred_fallthru
          _
      $region12: #{moe_forward.1} parent=5 // pred_fallthru
        _
      %p311 = scmp.lt.s32.totalorder %s24, 4
      // Predicated region
      $region21: #{moe_forward.1} parent=5 // pred_check
        %p312 = pneg %p311
      $region22: #{moe_forward.1} parent=5 // pred_check_branch
        %314 = sbr.rel (%p312) target = $region24
      $region23: #{moe_forward.1} parent=5 // pred_region
        // Predicated region
        $region25: #{moe_forward.1} parent=23 // pred_check
          %p315 = pneg %p84
        $region26: #{moe_forward.1} parent=23 // pred_check_branch
          %317 = sbr.rel (%p315) target = $region28
        $region27: #{moe_forward.1} parent=23 // pred_region
          %s318 = sld [smem:[#allocation3 + %s32]]
          %p319 = scmp.lt.s32.totalorder %s318, 3
          %s320 = scalar_select %p319, %s318, 3
          %s321 = smul.addr %s320, 4
          %s322 = smul.addr %s321, 4
          %s323 = scalar_lea.vmem %s3, %s322
          %s324 = sld [smem:[#allocation3 + %s32]]
        $region28: #{moe_forward.1} parent=23 // pred_fallthru
          _
        // Predicated region
        $region29: #{moe_forward.1} parent=23 // pred_check
          %p325 = pneg %p112
        $region30: #{moe_forward.1} parent=23 // pred_check_branch
          %327 = sbr.rel (%p325) target = $region32
        $region31: #{moe_forward.1} parent=23 // pred_region
          %s328 = sld [smem:[#allocation3 + %s32]]
          %p329 = scmp.lt.s32.totalorder %s328, 3
          %s330 = scalar_select %p329, %s328, 3
          %s331 = scalar_lea.vmem %s4, %s330
          %s332 = sld [smem:[#allocation3 + %s32]]
        $region32: #{moe_forward.1} parent=23 // pred_fallthru
          _
        // Predicated region
        $region33: #{moe_forward.1} parent=23 // pred_check
          %p333 = pneg %p140
        $region34: #{moe_forward.1} parent=23 // pred_check_branch
          %335 = sbr.rel (%p333) target = $region36
        $region35: #{moe_forward.1} parent=23 // pred_region
          %s336 = sld [smem:[#allocation3 + %s32]]
          %p337 = scmp.lt.s32.totalorder %s336, 3
          %s338 = scalar_select %p337, %s336, 3
          %s339 = scalar_lea.vmem %s5, %s338
          %s340 = sld [smem:[#allocation3 + %s32]]
        $region36: #{moe_forward.1} parent=23 // pred_fallthru
          _
        // Predicated region
        $region37: #{moe_forward.1} parent=23 // pred_check
          %p341 = pneg %p168
        $region38: #{moe_forward.1} parent=23 // pred_check_branch
          %343 = sbr.rel (%p341) target = $region40
        $region39: #{moe_forward.1} parent=23 // pred_region
          %s344 = sld [smem:[#allocation3 + %s32]]
          %p345 = scmp.lt.s32.totalorder %s344, 3
          %s346 = scalar_select %p345, %s344, 3
          %s347 = scalar_lea.vmem %s6, %s346
          %s348 = sld [smem:[#allocation3 + %s32]]
        $region40: #{moe_forward.1} parent=23 // pred_fallthru
          _
        // Predicated region
        $region41: #{moe_forward.1} parent=23 // pred_check
          %p349 = pneg %p196
        $region42: #{moe_forward.1} parent=23 // pred_check_branch
          %351 = sbr.rel (%p349) target = $region44
        $region43: #{moe_forward.1} parent=23 // pred_region
          %s352 = sld [smem:[#allocation3 + %s32]]
          %p353 = scmp.lt.s32.totalorder %s352, 3
          %s354 = scalar_select %p353, %s352, 3
          %s355 = smul.addr %s354, 8
          %s356 = smul.addr %s355, 4
          %s357 = scalar_lea.vmem %s7, %s356
          %s358 = sld [smem:[#allocation3 + %s32]]
        $region44: #{moe_forward.1} parent=23 // pred_fallthru
          _
        // Predicated region
        $region45: #{moe_forward.1} parent=23 // pred_check
          %p359 = pneg %p224
        $region46: #{moe_forward.1} parent=23 // pred_check_branch
          %361 = sbr.rel (%p359) target = $region48
        $region47: #{moe_forward.1} parent=23 // pred_region
          %s362 = sld [smem:[#allocation3 + %s32]]
          %p363 = scmp.lt.s32.totalorder %s362, 3
          %s364 = scalar_select %p363, %s362, 3
          %s365 = scalar_lea.vmem %s8, %s364
          %s366 = sld [smem:[#allocation3 + %s32]]
        $region48: #{moe_forward.1} parent=23 // pred_fallthru
          _
      $region24: #{moe_forward.1} parent=5 // pred_fallthru
        _
      %p367 = scmp.le.s32.totalorder 1, %s24
      %p368 = scmp.lt.s32.totalorder %s24, 5
      %p369 = pnand %p367, %p368
      %p370 = pneg %p369
      // Predicated region
      $region49: #{moe_forward.1} parent=5 // pred_check
        _
      $region50: #{moe_forward.1} parent=5 // pred_check_branch
        %372 = sbr.rel (%p369) target = $region52
      $region51: #{moe_forward.1} parent=5 // pred_region
        %s373 = ssub.s32 %s24, 1
        %p374 = scmp.lt.s32.totalorder %s33, 0
        %s375 = scalar_select %p374, %s33, 0
        %s376 = smul.addr %s375, 8
        %s377 = scalar_lea.vmem %s2, %s376
        %p378 = pneg %p62
        %p379 = pneg %p59
        %s380 = sld [smem:[#allocation3 + %s34]]
        %p381 = scmp.lt.s32.totalorder %s380, 3
        %s382 = scalar_select %p381, %s380, 3
        %s383 = smul.addr %s382, 4
        %s384 = smul.addr %s383, 4
        %s385 = scalar_lea.vmem %s3, %s384
        %p386 = pneg %p90
        %p387 = pneg %p87
        %s388 = sld [smem:[#allocation3 + %s34]]
        %p389 = scmp.lt.s32.totalorder %s388, 3
        %s390 = scalar_select %p389, %s388, 3
        %s391 = scalar_lea.vmem %s4, %s390
        %p392 = pneg %p118
        %p393 = pneg %p115
        %s394 = sld [smem:[#allocation3 + %s34]]
        %p395 = scmp.lt.s32.totalorder %s394, 3
        %s396 = scalar_select %p395, %s394, 3
        %s397 = scalar_lea.vmem %s5, %s396
        %p398 = pneg %p146
        %p399 = pneg %p143
        %s400 = sld [smem:[#allocation3 + %s34]]
        %p401 = scmp.lt.s32.totalorder %s400, 3
        %s402 = scalar_select %p401, %s400, 3
        %s403 = scalar_lea.vmem %s6, %s402
        %p404 = pneg %p174
        %p405 = pneg %p171
        %s406 = sld [smem:[#allocation3 + %s34]]
        %p407 = scmp.lt.s32.totalorder %s406, 3
        %s408 = scalar_select %p407, %s406, 3
        %s409 = smul.addr %s408, 8
        %s410 = smul.addr %s409, 4
        %s411 = scalar_lea.vmem %s7, %s410
        %p412 = pneg %p202
        %p413 = pneg %p199
        %s414 = sld [smem:[#allocation3 + %s34]]
        %p415 = scmp.lt.s32.totalorder %s414, 3
        %s416 = scalar_select %p415, %s414, 3
        %s417 = scalar_lea.vmem %s8, %s416
        %p418 = pneg %p230
        %p419 = pneg %p227
        %p420 = scmp.lt.s32.totalorder %s33, 0
        %s421 = scalar_select %p420, %s33, 0
        %s422 = smul.addr %s421, 8
        %s423 = scalar_lea.vmem %s9, %s422
        %p424 = pneg %p256
        %p425 = pneg %p253
        %p426 = pneg %p282
        %p427 = pneg %p279
        %p428 = scmp.lt.s32.totalorder %s33, 0
        %s429 = scalar_select %p428, %s33, 0
        %s430 = smul.addr %s429, 8
        %s431 = scalar_lea.vmem %s2, %s430
        %s432 = sld [smem:[#allocation3 + %s34]]
        %p433 = scmp.lt.s32.totalorder %s432, 3
        %s434 = scalar_select %p433, %s432, 3
        %s435 = smul.addr %s434, 4
        %s436 = smul.addr %s435, 4
        %s437 = scalar_lea.vmem %s3, %s436
        %s438 = sld [smem:[#allocation3 + %s34]]
        %s439 = sld [smem:[#allocation3 + %s34]]
        %p440 = scmp.lt.s32.totalorder %s439, 3
        %s441 = scalar_select %p440, %s439, 3
        %s442 = scalar_lea.vmem %s4, %s441
        %s443 = sld [smem:[#allocation3 + %s34]]
        %s444 = sld [smem:[#allocation3 + %s34]]
        %p445 = scmp.lt.s32.totalorder %s444, 3
        %s446 = scalar_select %p445, %s444, 3
        %s447 = scalar_lea.vmem %s5, %s446
        %s448 = sld [smem:[#allocation3 + %s34]]
        %s449 = sld [smem:[#allocation3 + %s34]]
        %p450 = scmp.lt.s32.totalorder %s449, 3
        %s451 = scalar_select %p450, %s449, 3
        %s452 = scalar_lea.vmem %s6, %s451
        %s453 = sld [smem:[#allocation3 + %s34]]
        %s454 = sld [smem:[#allocation3 + %s34]]
        %p455 = scmp.lt.s32.totalorder %s454, 3
        %s456 = scalar_select %p455, %s454, 3
        %s457 = smul.addr %s456, 8
        %s458 = smul.addr %s457, 4
        %s459 = scalar_lea.vmem %s7, %s458
        %s460 = sld [smem:[#allocation3 + %s34]]
        %s461 = sld [smem:[#allocation3 + %s34]]
        %p462 = scmp.lt.s32.totalorder %s461, 3
        %s463 = scalar_select %p462, %s461, 3
        %s464 = scalar_lea.vmem %s8, %s463
        %s465 = sld [smem:[#allocation3 + %s34]]
        %p466 = scmp.lt.s32.totalorder %s33, 0
        %s467 = scalar_select %p466, %s33, 0
        %s468 = smul.addr %s467, 8
        %s469 = scalar_lea.vmem %s9, %s468
        %p471 = scmp.eq.s32.totalorder %s34, 0
        // Predicated region
        $region53: #{moe_forward.1} parent=51 // pred_check
          %p472 = pneg %p471
        $region54: #{moe_forward.1} parent=51 // pred_check_branch
          %474 = sbr.rel (%p472) target = $region56
        $region55: #{moe_forward.1} parent=51 // pred_region
          %475 = vst [vmem:[#allocation5] sm:$0xff] 0.0
        $region56: #{moe_forward.1} parent=51 // pred_fallthru
          _
        %s476 = sld [smem:[#allocation4]]
        %p477 = scmp.lt.s32.totalorder %s34, %s476
        // Predicated region
        $region57: #{moe_forward.1} parent=51 // pred_check
          %p478 = pneg %p477
        $region58: #{moe_forward.1} parent=51 // pred_check_branch
          %480 = sbr.rel (%p478) target = $region60
        $region59: #{moe_forward.1} parent=51 // pred_region
          %s481 = sld [smem:[#allocation3 + %s34]]
          %v482 = vld [vmem:[%s431] sm:$0xff]
          %v483 = vpack.c.bf16 %v482, %v482
          %v484 = vld [vmem:[%s437] sm:$0xf]
          %v485 = vld [vmem:[%s437 + $0x4] sm:$0xf]
          %v486 = vld [vmem:[%s437 + $0x8] sm:$0xf]
          %v487 = vld [vmem:[%s437 + $0xc] sm:$0xf]
          %v488 = vld [vmem:[%s442] sm:$0x1]
          %v490 = vlaneseq
          %v491 = vshrl.u32 %v490, 7
          %v492 = vsub.s32 0, %v491
          %v493 = vrot.slane %v488, %v492
          %v499 = vunpack.c.l.b16 %v484
          %v500 = vunpack.c.l.b16 %v485
          %v501 = vunpack.c.l.b16 %v486
          %v502 = vunpack.c.l.b16 %v487
          %v503 = vpack.c.b16 %v500, %v499
          %v504 = vpack.c.b16 %v502, %v501
          %vm507 = vcmask 261120
          %v509 = vsel %vm507, %v483, 0
          %511 = vmatprep.subr.bf16.mxu0 0
          %512 = vmatpush1.bf16.msra.mxu0 0
          %513 = vmatprep.subr.bf16.mxu0 0
          %514 = vmatpush1.bf16.msra.mxu0 0
          %515 = vmatprep.subr.bf16.mxu0 0
          %516 = vmatpush1.bf16.msra.mxu0 0
          %517 = vmatprep.subr.bf16.mxu0 0
          %518 = vmatpush1.bf16.msra.mxu0 0
          %519 = vmatprep.subr.bf16.mxu0 0
          %520 = vmatpush1.bf16.msra.mxu0 0
          %521 = vmatprep.subr.bf16.mxu0 0
          %522 = vmatpush1.bf16.msra.mxu0 0
          %523 = vmatprep.subr.bf16.mxu0 0
          %524 = vmatpush1.bf16.msra.mxu0 %v504
          %525 = vmatprep.subr.bf16.mxu0 0
          %526 = vmatpush1.bf16.msra.mxu0 %v503
          %527 = vmatprep.subr.bf16.mxu0 0
          %528 = vmatpush2.bf16.msra.mxu0 0
          %529 = vmatprep.subr.bf16.mxu0 0
          %530 = vmatpush2.bf16.msra.mxu0 0
          %531 = vmatprep.subr.bf16.mxu0 0
          %532 = vmatpush2.bf16.msra.mxu0 0
          %533 = vmatprep.subr.bf16.mxu0 0
          %534 = vmatpush2.bf16.msra.mxu0 0
          %535 = vmatprep.subr.bf16.mxu0 0
          %536 = vmatpush2.bf16.msra.mxu0 0
          %537 = vmatprep.subr.bf16.mxu0 0
          %538 = vmatpush2.bf16.msra.mxu0 0
          %539 = vmatprep.subr.bf16.mxu0 0
          %540 = vmatpush2.bf16.msra.mxu0 0
          %541 = vmatprep.subr.bf16.mxu0 0
          %542 = vmatpush2.bf16.msra.mxu0 0
          %543 = vmatprep.mubr.bf16.mxu0 0
          %544 = vmatmul.mubr.bf16.gmra.mxu0 %v509
          %v545 = vpop.f32.mrf.mxu0
          %v546 = vadd.f32 %v493, %v545
          %v547 = vpop.f32.mrf.mxu0
          %v548 = vpop.f32.mrf.mxu0
          %v549 = vpop.f32.mrf.mxu0
          %550 = vdwg.mxu0
          %vm551 = vcmask 523264
          %v552 = vsel %vm551, %v546, 0.0
          %553 = vadd.xlane.f32.xlu0 %v552
          %v554 = vpop.xlane.xlu0 %553
          %v555 = vrcp.pop 64.0
          %v556 = vmul.f32 %v554, %v555
          %v557 = vsub.f32 %v546, %v556
          %v558 = vmul.f32 %v557, %v557
          %v559 = vsel %vm551, %v558, 0.0
          %560 = vadd.xlane.f32.xlu0 %v559
          %v561 = vpop.xlane.xlu0 %560
          %v562 = vmul.f32 %v561, %v555
          %v563 = vadd.f32 %v562, 1e-05
          %v564 = vrsqrt.pop %v563
          %v565 = vmul.f32 %v557, %v564
          %v566 = vld [vmem:[%s447] sm:$0x1]
          %v568 = vlaneseq
          %v569 = vshrl.u32 %v568, 7
          %v570 = vsub.s32 0, %v569
          %v571 = vrot.slane %v566, %v570
          %v573 = vmul.f32 %v565, %v571
          %v574 = vld [vmem:[%s452] sm:$0x1]
          %v576 = vlaneseq
          %v577 = vshrl.u32 %v576, 7
          %v578 = vsub.s32 0, %v577
          %v579 = vrot.slane %v574, %v578
          %v581 = vadd.f32 %v573, %v579
          %v582 = vmax.f32 %v581, 0.0
          %v583 = vpack.c.bf16 %v582, %v582
          %v584 = vld [vmem:[%s459] sm:$0xf]
          %v585 = vld [vmem:[%s459 + $0x4] sm:$0xf]
          %v586 = vld [vmem:[%s459 + $0x8] sm:$0xf]
          %v587 = vld [vmem:[%s459 + $0xc] sm:$0xf]
          %v588 = vld [vmem:[%s459 + $0x10] sm:$0xf]
          %v589 = vld [vmem:[%s459 + $0x14] sm:$0xf]
          %v590 = vld [vmem:[%s459 + $0x18] sm:$0xf]
          %v591 = vld [vmem:[%s459 + $0x1c] sm:$0xf]
          %v592 = vld [vmem:[%s464] sm:$0x1]
          %v594 = vlaneseq
          %v595 = vshrl.u32 %v594, 7
          %v596 = vsub.s32 0, %v595
          %v597 = vrot.slane %v592, %v596
          %v607 = vunpack.c.l.b16 %v584
          %v608 = vunpack.c.l.b16 %v585
          %v609 = vunpack.c.l.b16 %v586
          %v610 = vunpack.c.l.b16 %v587
          %v611 = vunpack.c.l.b16 %v588
          %v612 = vunpack.c.l.b16 %v589
          %v613 = vunpack.c.l.b16 %v590
          %v614 = vunpack.c.l.b16 %v591
          %v615 = vpack.c.b16 %v608, %v607
          %v616 = vpack.c.b16 %v610, %v609
          %v617 = vpack.c.b16 %v612, %v611
          %v618 = vpack.c.b16 %v614, %v613
          %v624 = vsel %vm551, %v583, 0
          %626 = vmatprep.subr.bf16.mxu0 0
          %627 = vmatpush1.bf16.msra.mxu0 0
          %628 = vmatprep.subr.bf16.mxu0 0
          %629 = vmatpush1.bf16.msra.mxu0 0
          %630 = vmatprep.subr.bf16.mxu0 0
          %631 = vmatpush1.bf16.msra.mxu0 0
          %632 = vmatprep.subr.bf16.mxu0 0
          %633 = vmatpush1.bf16.msra.mxu0 0
          %634 = vmatprep.subr.bf16.mxu0 0
          %635 = vmatpush1.bf16.msra.mxu0 %v618
          %636 = vmatprep.subr.bf16.mxu0 0
          %637 = vmatpush1.bf16.msra.mxu0 %v617
          %638 = vmatprep.subr.bf16.mxu0 0
          %639 = vmatpush1.bf16.msra.mxu0 %v616
          %640 = vmatprep.subr.bf16.mxu0 0
          %641 = vmatpush1.bf16.msra.mxu0 %v615
          %642 = vmatprep.subr.bf16.mxu0 0
          %643 = vmatpush2.bf16.msra.mxu0 0
          %644 = vmatprep.subr.bf16.mxu0 0
          %645 = vmatpush2.bf16.msra.mxu0 0
          %646 = vmatprep.subr.bf16.mxu0 0
          %647 = vmatpush2.bf16.msra.mxu0 0
          %648 = vmatprep.subr.bf16.mxu0 0
          %649 = vmatpush2.bf16.msra.mxu0 0
          %650 = vmatprep.subr.bf16.mxu0 0
          %651 = vmatpush2.bf16.msra.mxu0 0
          %652 = vmatprep.subr.bf16.mxu0 0
          %653 = vmatpush2.bf16.msra.mxu0 0
          %654 = vmatprep.subr.bf16.mxu0 0
          %655 = vmatpush2.bf16.msra.mxu0 0
          %656 = vmatprep.subr.bf16.mxu0 0
          %657 = vmatpush2.bf16.msra.mxu0 0
          %658 = vmatprep.mubr.bf16.mxu0 0
          %659 = vmatmul.mubr.bf16.gmra.mxu0 %v624
          %v660 = vpop.f32.mrf.mxu0
          %v661 = vadd.f32 %v597, %v660
          %v662 = vpop.f32.mrf.mxu0
          %v663 = vpop.f32.mrf.mxu0
          %v664 = vpop.f32.mrf.mxu0
          %665 = vdwg.mxu0
          %v666 = vxor.u32 %v661, 2147483648
          %v667 = vmul.f32 %v666, 1.442695
          %v668 = vpow.pop %v667
          %v669 = vadd.f32 %v668, 1.0
          %v670 = vrcp.pop %v669
          %v671 = vmul.f32 1.0, %v670
          %v672 = vlaneseq
          %v673 = vand.u32 %v672, 127
          %v674 = vstv %s481
          %vm675 = vcmp.eq.s32.totalorder %v673, %v674
          %v676 = vld [vmem:[%s469] sm:$0xff]
          %v677 = vsel %vm675, %v676, 0.0
          %vm678 = vcmask 31744
          %v679 = vsel %vm678, %v677, 0.0
          %680 = vadd.xlane.f32.xlu0 %v679
          %v681 = vpop.xlane.xlu0 %680
          %v682 = vld [vmem:[#allocation5] sm:$0xff]
          %v683 = vmul.f32 %v681, %v671
          %v684 = vadd.f32 %v682, %v683
          %685 = vst [vmem:[#allocation5] sm:$0xff] %v684
        $region60: #{moe_forward.1} parent=51 // pred_fallthru
          _
        // Predicated region
        $region61: #{moe_forward.1} parent=51 // pred_check
          %p686 = pneg %p279
        $region62: #{moe_forward.1} parent=51 // pred_check_branch
          %688 = sbr.rel (%p686) target = $region64
        $region63: #{moe_forward.1} parent=51 // pred_region
          %s690 = ssub.s32 128, 128
          %691 = vsyncadd [#allocation6], %s690
          %s692 = smul.addr %s33, 128
          %s693 = scalar_lea.hbm %s10, %s692
          %s695 = sshll.u32 [#allocation5], 4
          %s696 = int_to_ptr.vmem [resolvable:$true] %s695
          %698 = dma.vmem_to_hbm [thread:$0]  %s696, 128, %s693, [#allocation6]
        $region64: #{moe_forward.1} parent=51 // pred_fallthru
          _
        // Predicated region
        $region65: #{moe_forward.1} parent=51 // pred_check
          %p699 = pneg %p279
        $region66: #{moe_forward.1} parent=51 // pred_check_branch
          %701 = sbr.rel (%p699) target = $region68
        $region67: #{moe_forward.1} parent=51 // pred_region
          %702 = dma.done [#allocation6], 128
        $region68: #{moe_forward.1} parent=51 // pred_fallthru
          _
      $region52: #{moe_forward.1} parent=5 // pred_fallthru
        _
      %p703 = scmp.le.s32.totalorder 2, %s24
      // Predicated region
      $region69: #{moe_forward.1} parent=5 // pred_check
        %p704 = pneg %p703
      $region70: #{moe_forward.1} parent=5 // pred_check_branch
        %706 = sbr.rel (%p704) target = $region72
      $region71: #{moe_forward.1} parent=5 // pred_region
        %s707 = ssub.s32 %s24, 2
      $region72: #{moe_forward.1} parent=5 // pred_fallthru
        _
    $region6: #{moe_forward.1} parent=1 // loop_footer
      %s28 = sadd.s32 1, %s24
    $region7: #{moe_forward.1} parent=1 // loop_footer_branch
      %23 = sbr.rel target = $region3
    $region8: #{moe_forward.1} parent=1 // loop_exit
      _
    %708 = vsyncpa [#allocation6], 1
    %s709 = scalar_lea.sflag [#allocation6], 1
    %710 = vsyncpa %s709, 1

</llo_original>
